<compile_context>
chip_gen: v7x
topology: tpu7x:2x2x1
jax: 0.10.0
libtpu: 0.0.40
codegen_flags: <defaults>
</compile_context>

<pallas_src>
import math

import jax
import jax.numpy as jnp
from jax.experimental import pallas as pl
from jax.experimental.pallas import tpu as pltpu


def fused_classifier_kernel(x_ref, wc_ref, w1_ref, b1_ref, w2_ref, b2_ref, out_ref):
    """Whole Classifier forward for one batch tile, resident in VMEM.

    x_ref  : (Bblk, C)            squeezed input rows
    wc_ref : (C, P * F_pad)       structured conv weight: P Toeplitz slabs, each
                                  slab's columns in channel-major (c*Lp + j)
                                  order, zero-padded to F_pad lanes
    w1_ref : (F_pad, featuredim)  fc1 weight, zero rows past the real F
    b1_ref : (1, featuredim)      fc1 bias with the conv bias folded in
    w2_ref : (featuredim, n_classes)
    b2_ref : (1, n_classes)
    out_ref: (Bblk, n_classes)
    """
    f_pad = w1_ref.shape[0]
    p_sz = wc_ref.shape[1] // f_pad

    # Conv1d over every pooling offset as ONE MXU push.
    y = jnp.dot(x_ref[...], wc_ref[...], preferred_element_type=jnp.float32)

    # MaxPool1d: elementwise max over the P slabs.  Slab starts are multiples
    # of 128 (F_pad is 128-aligned) -> clean, unmasked lane slices.
    pooled = y[:, 0:f_pad]
    for p in range(1, p_sz):  # static unroll; P is tiny (ceil(K/5))
        pooled = jnp.maximum(pooled, y[:, p * f_pad:(p + 1) * f_pad])

    # fc1 + tanh + output head (conv bias already folded into b1).
    h = jnp.tanh(jnp.dot(pooled, w1_ref[...], preferred_element_type=jnp.float32)
                 + b1_ref[...])
    out_ref[...] = (jnp.dot(h, w2_ref[...], preferred_element_type=jnp.float32)
                    + b2_ref[...]).astype(out_ref.dtype)


def _round_up(x, m):
    return ((x + m - 1) // m) * m


class ClassifierPallas:
    """JAX / Pallas port of the PyTorch `Classifier` module."""

    OUT_CHANNELS = 20

    def __init__(self, input_channels, featuredim, n_classes,
                 kernel_size=None, pool_size=None, key=None):
        if kernel_size is None:
            kernel_size = math.ceil(input_channels / 9)
        if pool_size is None:
            pool_size = math.ceil(kernel_size / 5)
        self.input_channels = input_channels
        self.kernel_size = kernel_size
        self.pool_size = pool_size
        self.l_conv = input_channels - kernel_size + 1
        # MaxPool1d(pool_size): stride = pool_size, no padding, floor mode.
        self.l_pool = self.l_conv // pool_size
        assert self.l_conv >= 1 and self.l_pool >= 1, "degenerate conv/pool config"
        self.features_size = self.OUT_CHANNELS * self.l_pool
        self.featuredim = featuredim
        self.n_classes = n_classes

        if key is None:
            key = jax.random.PRNGKey(0)
        k1, k2, k3, k4, k5, k6 = jax.random.split(key, 6)

        def u(k, shape, fan_in):
            bound = 1.0 / math.sqrt(fan_in)
            return jax.random.uniform(k, shape, jnp.float32, -bound, bound)

        # Parameters in PyTorch-equivalent layout (used by the pure-JAX reference).
        self.conv_w = u(k1, (self.OUT_CHANNELS, kernel_size), kernel_size)  # (20, K)
        self.conv_b = u(k2, (self.OUT_CHANNELS,), kernel_size)              # (20,)
        self.fc1_w = u(k3, (self.features_size, featuredim), self.features_size)
        self.fc1_b = u(k4, (1, featuredim), self.features_size)
        self.out_w = u(k5, (featuredim, n_classes), featuredim)
        self.out_b = u(k6, (1, n_classes), featuredim)

        self._build_kernel_params()

    def _build_kernel_params(self):
        """One-time offline restructuring of the weights for the fused kernel."""
        C, K = self.input_channels, self.kernel_size
        P, Lp = self.pool_size, self.l_pool
        nc = self.OUT_CHANNELS
        F = self.features_size
        F_pad = _round_up(F, 128)          # lane-align each pooling slab
        self.f_pad = F_pad

        # Structured conv weight (C, P*F_pad):
        #   wc[i, p*F_pad + c*Lp + j] = conv_w[c, i - (j*P + p)]  if the tap is
        #   in range, else 0.  Column ordering == PyTorch channel-major flatten.
        i = jnp.arange(C).reshape(C, 1, 1, 1)
        p = jnp.arange(P).reshape(1, P, 1, 1)
        c = jnp.arange(nc).reshape(1, 1, nc, 1)
        j = jnp.arange(Lp).reshape(1, 1, 1, Lp)
        tap = i - (j * P + p)                                    # (C, P, 1, Lp)
        valid = ((tap >= 0) & (tap < K)).astype(jnp.float32)
        vals = self.conv_w[c, jnp.clip(tap, 0, K - 1)] * valid   # (C, P, nc, Lp)
        wc = jnp.zeros((C, P, F_pad), jnp.float32)
        wc = wc.at[:, :, :F].set(vals.reshape(C, P, F))
        self.wconv_big = wc.reshape(C, P * F_pad)

        # fc1 weight padded to F_pad rows (zero rows kill the pad lanes).
        w1 = jnp.zeros((F_pad, self.featuredim), jnp.float32)
        self.w1_pad = w1.at[:F, :].set(self.fc1_w)

        # Fold the conv bias (constant w.r.t. the max) through fc1:
        #   tanh((pooled + b_conv_vec) @ W1 + b1) == tanh(pooled @ W1 + b1_eff)
        bias_vec = jnp.zeros((F_pad,), jnp.float32).at[:F].set(
            jnp.repeat(self.conv_b, Lp))
        self.b1_eff = self.fc1_b + bias_vec @ self.w1_pad        # (1, featuredim)

    def __call__(self, x):
        # x: (B, C, 1, 1) float32 — same as the torch input; squeeze trailing 1x1.
        b = x.shape[0]
        x2 = x.reshape(b, self.input_channels)

        # Single grid step for small batches; 128-row tiles sharded across
        # TensorCores ("parallel") when the batch is large and divisible.
        block_b = 128 if (b > 128 and b % 128 == 0) else b
        grid = (b // block_b,)

        C = self.input_channels

        def full_spec(arr):
            return pl.BlockSpec(arr.shape, lambda i: (0,) * arr.ndim)

        return pl.pallas_call(
            fused_classifier_kernel,
            out_shape=jax.ShapeDtypeStruct((b, self.n_classes), jnp.float32),
            grid=grid,
            in_specs=[
                pl.BlockSpec((block_b, C), lambda i: (i, 0)),
                full_spec(self.wconv_big),
                full_spec(self.w1_pad),
                full_spec(self.b1_eff),
                full_spec(self.out_w),
                full_spec(self.out_b),
            ],
            out_specs=pl.BlockSpec((block_b, self.n_classes), lambda i: (i, 0)),
            compiler_params=pltpu.CompilerParams(
                dimension_semantics=("parallel",)),
        )(x2, self.wconv_big, self.w1_pad, self.b1_eff, self.out_w, self.out_b)

    # Pure-JAX reference of the same forward (for correctness check only).
    def reference(self, x):
        b = x.shape[0]
        x2 = x.reshape(b, self.input_channels)
        L = self.l_conv
        y = jnp.zeros((b, self.OUT_CHANNELS, L), jnp.float32)
        for k in range(self.kernel_size):
            y = y + x2[:, None, k:k + L] * self.conv_w[None, :, k, None]
        y = y + self.conv_b.reshape(1, self.OUT_CHANNELS, 1)
        lp, p = self.l_pool, self.pool_size
        pooled = y[:, :, :lp * p].reshape(b, self.OUT_CHANNELS, lp, p).max(-1)
        feat = pooled.reshape(b, self.features_size)
        h = jnp.tanh(feat @ self.fc1_w + self.fc1_b)
        return h @ self.out_w + self.out_b


if __name__ == "__main__":
    INPUT_CHANNELS = 64        # -> kernel_size = ceil(64/9) = 8, pool_size = 2
    FEATUREDIM = 32
    N_CLASSES = 10
    BATCH = 2

    key = jax.random.PRNGKey(0)
    kx, kp, kx2 = jax.random.split(key, 3)
    model = ClassifierPallas(INPUT_CHANNELS, FEATUREDIM, N_CLASSES, key=kp)

    # Small batch: single grid step (whole-array blocks).
    x = jax.random.normal(kx, (BATCH, INPUT_CHANNELS, 1, 1), jnp.float32)
    out = jax.jit(model.__call__)(x)
    jax.block_until_ready(out)
    assert out.shape == (BATCH, N_CLASSES)
    ref = model.reference(x)
    assert jnp.allclose(out, ref, rtol=1e-3, atol=1e-3), "mismatch vs reference (small batch)"

    # Larger batch: exercises the parallel batch grid (2 tiles of 128 rows).
    xb = jax.random.normal(kx2, (256, INPUT_CHANNELS, 1, 1), jnp.float32)
    outb = jax.jit(model.__call__)(xb)
    jax.block_until_ready(outb)
    assert outb.shape == (256, N_CLASSES)
    refb = model.reference(xb)
    assert jnp.allclose(outb, refb, rtol=1e-3, atol=1e-3), "mismatch vs reference (batch grid)"

    print("KERNEL_OK")
</pallas_src>

<mosaic_0001>
module attributes {stable_mosaic.version = 11 : i64} {
  func.func @fused_classifier_kernel(%arg0: i32, %arg1: memref<2x64xf32, #tpu.memory_space<vmem>>, %arg2: memref<64x1280xf32, #tpu.memory_space<vmem>>, %arg3: memref<640x32xf32, #tpu.memory_space<vmem>>, %arg4: memref<1x32xf32, #tpu.memory_space<vmem>>, %arg5: memref<32x10xf32, #tpu.memory_space<vmem>>, %arg6: memref<1x10xf32, #tpu.memory_space<vmem>>, %arg7: memref<2x10xf32, #tpu.memory_space<vmem>>) attributes {dimension_semantics = [#tpu.dimension_semantics<parallel>], iteration_bounds = array<i64: 1>, scalar_prefetch = 0 : i64, scratch_operands = 0 : i64, tpu.core_type = #tpu.core_type<tc>, window_params = [{transform_indices = @transform_0, window_bounds = array<i64: 2, 64>}, {pipeline_mode = #tpu.pipeline_mode<synchronous>, transform_indices = @transform_1, window_bounds = array<i64: 64, 1280>}, {pipeline_mode = #tpu.pipeline_mode<synchronous>, transform_indices = @transform_2, window_bounds = array<i64: 640, 32>}, {pipeline_mode = #tpu.pipeline_mode<synchronous>, transform_indices = @transform_3, window_bounds = array<i64: 1, 32>}, {pipeline_mode = #tpu.pipeline_mode<synchronous>, transform_indices = @transform_4, window_bounds = array<i64: 32, 10>}, {pipeline_mode = #tpu.pipeline_mode<synchronous>, transform_indices = @transform_5, window_bounds = array<i64: 1, 10>}, {transform_indices = @transform_6, window_bounds = array<i64: 2, 10>}]} {
    %c0 = arith.constant 0 : index
    %c0_0 = arith.constant 0 : index
    %0 = vector.load %arg1[%c0, %c0_0] : memref<2x64xf32, #tpu.memory_space<vmem>>, vector<2x64xf32>
    %c0_1 = arith.constant 0 : index
    %c0_2 = arith.constant 0 : index
    %1 = vector.load %arg2[%c0_1, %c0_2] : memref<64x1280xf32, #tpu.memory_space<vmem>>, vector<64x1280xf32>
    %cst = arith.constant dense<0.000000e+00> : vector<2x1280xf32>
    %2 = tpu.matmul %0, %1, %cst {dimension_numbers = #tpu.dot_dimension_numbers<[1], [0], [0], [1], [0, 0, 1, 1], [], []>} : vector<2x64xf32>, vector<64x1280xf32>, vector<2x1280xf32> -> vector<2x1280xf32>
    %3 = vector.extract_strided_slice %2 {offsets = [0, 0], sizes = [2, 640], strides = [1, 1]} : vector<2x1280xf32> to vector<2x640xf32>
    %4 = vector.extract_strided_slice %2 {offsets = [0, 640], sizes = [2, 640], strides = [1, 1]} : vector<2x1280xf32> to vector<2x640xf32>
    %5 = arith.maximumf %3, %4 : vector<2x640xf32>
    %c0_3 = arith.constant 0 : index
    %c0_4 = arith.constant 0 : index
    %6 = vector.load %arg3[%c0_3, %c0_4] : memref<640x32xf32, #tpu.memory_space<vmem>>, vector<640x32xf32>
    %cst_5 = arith.constant dense<0.000000e+00> : vector<2x32xf32>
    %7 = tpu.matmul %5, %6, %cst_5 {dimension_numbers = #tpu.dot_dimension_numbers<[1], [0], [0], [1], [0, 0, 1, 1], [], []>} : vector<2x640xf32>, vector<640x32xf32>, vector<2x32xf32> -> vector<2x32xf32>
    %c0_6 = arith.constant 0 : index
    %c0_7 = arith.constant 0 : index
    %8 = vector.load %arg4[%c0_6, %c0_7] : memref<1x32xf32, #tpu.memory_space<vmem>>, vector<1x32xf32>
    %9 = vector.broadcast %8 : vector<1x32xf32> to vector<2x32xf32>
    %10 = arith.addf %7, %9 : vector<2x32xf32>
    %11 = math.tanh %10 : vector<2x32xf32>
    %c0_8 = arith.constant 0 : index
    %c0_9 = arith.constant 0 : index
    %12 = vector.load %arg5[%c0_8, %c0_9] : memref<32x10xf32, #tpu.memory_space<vmem>>, vector<32x10xf32>
    %cst_10 = arith.constant dense<0.000000e+00> : vector<2x10xf32>
    %13 = tpu.matmul %11, %12, %cst_10 {dimension_numbers = #tpu.dot_dimension_numbers<[1], [0], [0], [1], [0, 0, 1, 1], [], []>} : vector<2x32xf32>, vector<32x10xf32>, vector<2x10xf32> -> vector<2x10xf32>
    %c0_11 = arith.constant 0 : index
    %c0_12 = arith.constant 0 : index
    %14 = vector.load %arg6[%c0_11, %c0_12] : memref<1x10xf32, #tpu.memory_space<vmem>>, vector<1x10xf32>
    %15 = vector.broadcast %14 : vector<1x10xf32> to vector<2x10xf32>
    %16 = arith.addf %13, %15 : vector<2x10xf32>
    %c0_13 = arith.constant 0 : index
    %c0_14 = arith.constant 0 : index
    %17 = vector.load %arg7[%c0_13, %c0_14] : memref<2x10xf32, #tpu.memory_space<vmem>>, vector<2x10xf32>
    tpu.vector_store %arg7[%c0_13, %c0_14], %16 {strides = array<i32>} : memref<2x10xf32, #tpu.memory_space<vmem>>, vector<2x10xf32>,
    return
  }
  func.func @transform_0(%arg0: i32) -> (i32, i32) {
    %c0_i32 = arith.constant 0 : i32
    %c0_i32_0 = arith.constant 0 : i32
    return %arg0, %c0_i32 : i32, i32
  }
  func.func @transform_1(%arg0: i32) -> (i32, i32) {
    %c0_i32 = arith.constant 0 : i32
    %c0_i32_0 = arith.constant 0 : i32
    %c0_i32_1 = arith.constant 0 : i32
    return %c0_i32, %c0_i32_0 : i32, i32
  }
  func.func @transform_2(%arg0: i32) -> (i32, i32) {
    %c0_i32 = arith.constant 0 : i32
    %c0_i32_0 = arith.constant 0 : i32
    %c0_i32_1 = arith.constant 0 : i32
    return %c0_i32, %c0_i32_0 : i32, i32
  }
  func.func @transform_3(%arg0: i32) -> (i32, i32) {
    %c0_i32 = arith.constant 0 : i32
    %c0_i32_0 = arith.constant 0 : i32
    %c0_i32_1 = arith.constant 0 : i32
    return %c0_i32, %c0_i32_0 : i32, i32
  }
  func.func @transform_4(%arg0: i32) -> (i32, i32) {
    %c0_i32 = arith.constant 0 : i32
    %c0_i32_0 = arith.constant 0 : i32
    %c0_i32_1 = arith.constant 0 : i32
    return %c0_i32, %c0_i32_0 : i32, i32
  }
  func.func @transform_5(%arg0: i32) -> (i32, i32) {
    %c0_i32 = arith.constant 0 : i32
    %c0_i32_0 = arith.constant 0 : i32
    %c0_i32_1 = arith.constant 0 : i32
    return %c0_i32, %c0_i32_0 : i32, i32
  }
  func.func @transform_6(%arg0: i32) -> (i32, i32) {
    %c0_i32 = arith.constant 0 : i32
    %c0_i32_0 = arith.constant 0 : i32
    return %arg0, %c0_i32 : i32, i32
  }
}

</mosaic_0001>

<llo_original>
// kernel: a_call__.1
$region0: #{a_call__.1}
  #allocation0 [shape = 'u32[]', space=smem, size = 0x4, offset = 0x4, fixed_abs, tag = 'smem constant byte address 0x4 - core index']
  #allocation1 [shape = 'u32[144,128]{1,0:T(1,128)}', space=vmem, size = 0x12000, scoped, tag = 'internal scratch']
  %s0 = inlined_call_operand.vmem [shape: f32[2,64], index: 0, kind: input, shape index: {}]
  %s1 = inlined_call_operand.hbm [shape: f32[64,1280], index: 1, kind: input, shape index: {}]
  %s2 = inlined_call_operand.hbm [shape: f32[640,32], index: 2, kind: input, shape index: {}]
  %s3 = inlined_call_operand.vmem [shape: f32[1,32], index: 3, kind: input, shape index: {}]
  %s4 = inlined_call_operand.hbm [shape: f32[32,10], index: 4, kind: input, shape index: {}]
  %s5 = inlined_call_operand.vmem [shape: f32[1,10], index: 5, kind: input, shape index: {}]
  %s6 = inlined_call_operand.hbm [shape: f32[2,10], index: 6, kind: output, shape index: {}]
  %s7 = sld [smem:[#allocation0]]
  $region46: #{a_call__.1} parent=0
    _
  %s9 = ssub.s32 1, %s7
  %s10 = scalar_select 0, %s9, %s7
  $region1: #{a_call__.1} parent=0
    #allocation2 [shape = 'u8[327680]{0}', space=vmem, size = 0x50000, scoped, tag = 'input window, operand 1, single buffered']
    #allocation3 [shape = 's32[1]{0}', space=sflag, size = 0x4, scoped, tag = 'scoped memory for a_call__.1']
    #allocation4 [shape = 's32[1]{0}', space=sflag, size = 0x4, scoped, tag = 'scoped memory for a_call__.1']
    #allocation5 [shape = 'u8[327680]{0}', space=vmem, size = 0x50000, scoped, tag = 'input window, operand 2, single buffered']
    #allocation6 [shape = 's32[1]{0}', space=sflag, size = 0x4, scoped, tag = 'scoped memory for a_call__.1']
    #allocation7 [shape = 'u8[16384]{0}', space=vmem, size = 0x4000, scoped, tag = 'input window, operand 4, single buffered']
    #allocation8 [shape = 'u8[1024]{0}', space=vmem, size = 0x400, scoped, tag = 'output window, operand 0, single buffered']
    %11 = vsyncpa [#allocation3], 0
    %12 = vsyncpa [#allocation6], 0
    %13 = vsyncpa [#allocation4], 0
    // Predicated region
    $region2: #{a_call__.1} parent=1 // pred_check
      _
    $region3: #{a_call__.1} parent=1 // pred_check_branch
      %15 = sbr.rel (0) target = $region5
    $region4: #{a_call__.1} parent=1 // pred_region
      _
    $region5: #{a_call__.1} parent=1 // pred_fallthru
      _
    // Predicated region
    $region6: #{a_call__.1} parent=1 // pred_check
      _
    $region7: #{a_call__.1} parent=1 // pred_check_branch
      %17 = sbr.rel (0) target = $region9
    $region8: #{a_call__.1} parent=1 // pred_region
      %s19 = ssub.s32 10240, 10240
      %20 = vsyncadd [#allocation3], %s19
      %s21 = sshll.u32 [#allocation2], 4
      %s22 = int_to_ptr.vmem [resolvable:$true] %s21
      %27 = dma.hbm_to_vmem [thread:$0]  %s1, 10240, %s22, [#allocation3], 1280, 1280, 80
    $region9: #{a_call__.1} parent=1 // pred_fallthru
      _
    // Predicated region
    $region10: #{a_call__.1} parent=1 // pred_check
      _
    $region11: #{a_call__.1} parent=1 // pred_check_branch
      %29 = sbr.rel (0) target = $region13
    $region12: #{a_call__.1} parent=1 // pred_region
      %s31 = ssub.s32 10240, 10240
      %32 = vsyncadd [#allocation6], %s31
      %s33 = sshll.u32 [#allocation5], 4
      %s34 = int_to_ptr.vmem [resolvable:$true] %s33
      %39 = dma.hbm_to_vmem [thread:$0]  %s2, 10240, %s34, [#allocation6], 128, 128, 8
    $region13: #{a_call__.1} parent=1 // pred_fallthru
      _
    // Predicated region
    $region14: #{a_call__.1} parent=1 // pred_check
      _
    $region15: #{a_call__.1} parent=1 // pred_check_branch
      %41 = sbr.rel (0) target = $region17
    $region16: #{a_call__.1} parent=1 // pred_region
      _
    $region17: #{a_call__.1} parent=1 // pred_fallthru
      _
    // Predicated region
    $region18: #{a_call__.1} parent=1 // pred_check
      _
    $region19: #{a_call__.1} parent=1 // pred_check_branch
      %43 = sbr.rel (0) target = $region21
    $region20: #{a_call__.1} parent=1 // pred_region
      %s45 = ssub.s32 512, 512
      %46 = vsyncadd [#allocation6], %s45
      %s47 = sshll.u32 [#allocation7], 4
      %s48 = int_to_ptr.vmem [resolvable:$true] %s47
      %53 = dma.hbm_to_vmem [thread:$0]  %s4, 512, %s48, [#allocation6], 128, 128, 8
    $region21: #{a_call__.1} parent=1 // pred_fallthru
      _
    // Predicated region
    $region22: #{a_call__.1} parent=1 // pred_check
      _
    $region23: #{a_call__.1} parent=1 // pred_check_branch
      %55 = sbr.rel (0) target = $region25
    $region24: #{a_call__.1} parent=1 // pred_region
      _
    $region25: #{a_call__.1} parent=1 // pred_fallthru
      _
    // Predicated region
    $region26: #{a_call__.1} parent=1 // pred_check
      _
    $region27: #{a_call__.1} parent=1 // pred_check_branch
      %57 = sbr.rel (0) target = $region29
    $region28: #{a_call__.1} parent=1 // pred_region
      %58 = dma.done [#allocation3], 10240
    $region29: #{a_call__.1} parent=1 // pred_fallthru
      _
    // Predicated region
    $region30: #{a_call__.1} parent=1 // pred_check
      _
    $region31: #{a_call__.1} parent=1 // pred_check_branch
      %60 = sbr.rel (0) target = $region33
    $region32: #{a_call__.1} parent=1 // pred_region
      %61 = dma.done [#allocation6], 10240
    $region33: #{a_call__.1} parent=1 // pred_fallthru
      _
    // Predicated region
    $region34: #{a_call__.1} parent=1 // pred_check
      _
    $region35: #{a_call__.1} parent=1 // pred_check_branch
      %63 = sbr.rel (0) target = $region37
    $region36: #{a_call__.1} parent=1 // pred_region
      %64 = dma.done [#allocation6], 512
    $region37: #{a_call__.1} parent=1 // pred_fallthru
      _
    %v65 = vld [vmem:[%s0] sm:$0x3]
    %v66 = vld [vmem:[#allocation2] sm:$0xff]
    %v67 = vld [vmem:[#allocation2 + $0x8] sm:$0xff]
    %v68 = vld [vmem:[#allocation2 + $0x10] sm:$0xff]
    %v69 = vld [vmem:[#allocation2 + $0x18] sm:$0xff]
    %v70 = vld [vmem:[#allocation2 + $0x20] sm:$0xff]
    %v71 = vld [vmem:[#allocation2 + $0x28] sm:$0xff]
    %v72 = vld [vmem:[#allocation2 + $0x30] sm:$0xff]
    %v73 = vld [vmem:[#allocation2 + $0x38] sm:$0xff]
    %v74 = vld [vmem:[#allocation2 + $0x40] sm:$0xff]
    %v75 = vld [vmem:[#allocation2 + $0x48] sm:$0xff]
    %v76 = vld [vmem:[#allocation2 + $0x50] sm:$0xff]
    %v77 = vld [vmem:[#allocation2 + $0x58] sm:$0xff]
    %v78 = vld [vmem:[#allocation2 + $0x60] sm:$0xff]
    %v79 = vld [vmem:[#allocation2 + $0x68] sm:$0xff]
    %v80 = vld [vmem:[#allocation2 + $0x70] sm:$0xff]
    %v81 = vld [vmem:[#allocation2 + $0x78] sm:$0xff]
    %v82 = vld [vmem:[#allocation2 + $0x80] sm:$0xff]
    %v83 = vld [vmem:[#allocation2 + $0x88] sm:$0xff]
    %v84 = vld [vmem:[#allocation2 + $0x90] sm:$0xff]
    %v85 = vld [vmem:[#allocation2 + $0x98] sm:$0xff]
    %v86 = vld [vmem:[#allocation2 + $0xa0] sm:$0xff]
    %v87 = vld [vmem:[#allocation2 + $0xa8] sm:$0xff]
    %v88 = vld [vmem:[#allocation2 + $0xb0] sm:$0xff]
    %v89 = vld [vmem:[#allocation2 + $0xb8] sm:$0xff]
    %v90 = vld [vmem:[#allocation2 + $0xc0] sm:$0xff]
    %v91 = vld [vmem:[#allocation2 + $0xc8] sm:$0xff]
    %v92 = vld [vmem:[#allocation2 + $0xd0] sm:$0xff]
    %v93 = vld [vmem:[#allocation2 + $0xd8] sm:$0xff]
    %v94 = vld [vmem:[#allocation2 + $0xe0] sm:$0xff]
    %v95 = vld [vmem:[#allocation2 + $0xe8] sm:$0xff]
    %v96 = vld [vmem:[#allocation2 + $0xf0] sm:$0xff]
    %v97 = vld [vmem:[#allocation2 + $0xf8] sm:$0xff]
    %v98 = vld [vmem:[#allocation2 + $0x100] sm:$0xff]
    %v99 = vld [vmem:[#allocation2 + $0x108] sm:$0xff]
    %v100 = vld [vmem:[#allocation2 + $0x110] sm:$0xff]
    %v101 = vld [vmem:[#allocation2 + $0x118] sm:$0xff]
    %v102 = vld [vmem:[#allocation2 + $0x120] sm:$0xff]
    %v103 = vld [vmem:[#allocation2 + $0x128] sm:$0xff]
    %v104 = vld [vmem:[#allocation2 + $0x130] sm:$0xff]
    %v105 = vld [vmem:[#allocation2 + $0x138] sm:$0xff]
    %v106 = vld [vmem:[#allocation2 + $0x140] sm:$0xff]
    %v107 = vld [vmem:[#allocation2 + $0x148] sm:$0xff]
    %v108 = vld [vmem:[#allocation2 + $0x150] sm:$0xff]
    %v109 = vld [vmem:[#allocation2 + $0x158] sm:$0xff]
    %v110 = vld [vmem:[#allocation2 + $0x160] sm:$0xff]
    %v111 = vld [vmem:[#allocation2 + $0x168] sm:$0xff]
    %v112 = vld [vmem:[#allocation2 + $0x170] sm:$0xff]
    %v113 = vld [vmem:[#allocation2 + $0x178] sm:$0xff]
    %v114 = vld [vmem:[#allocation2 + $0x180] sm:$0xff]
    %v115 = vld [vmem:[#allocation2 + $0x188] sm:$0xff]
    %v116 = vld [vmem:[#allocation2 + $0x190] sm:$0xff]
    %v117 = vld [vmem:[#allocation2 + $0x198] sm:$0xff]
    %v118 = vld [vmem:[#allocation2 + $0x1a0] sm:$0xff]
    %v119 = vld [vmem:[#allocation2 + $0x1a8] sm:$0xff]
    %v120 = vld [vmem:[#allocation2 + $0x1b0] sm:$0xff]
    %v121 = vld [vmem:[#allocation2 + $0x1b8] sm:$0xff]
    %v122 = vld [vmem:[#allocation2 + $0x1c0] sm:$0xff]
    %v123 = vld [vmem:[#allocation2 + $0x1c8] sm:$0xff]
    %v124 = vld [vmem:[#allocation2 + $0x1d0] sm:$0xff]
    %v125 = vld [vmem:[#allocation2 + $0x1d8] sm:$0xff]
    %v126 = vld [vmem:[#allocation2 + $0x1e0] sm:$0xff]
    %v127 = vld [vmem:[#allocation2 + $0x1e8] sm:$0xff]
    %v128 = vld [vmem:[#allocation2 + $0x1f0] sm:$0xff]
    %v129 = vld [vmem:[#allocation2 + $0x1f8] sm:$0xff]
    %v130 = vld [vmem:[#allocation2 + $0x200] sm:$0xff]
    %v131 = vld [vmem:[#allocation2 + $0x208] sm:$0xff]
    %v132 = vld [vmem:[#allocation2 + $0x210] sm:$0xff]
    %v133 = vld [vmem:[#allocation2 + $0x218] sm:$0xff]
    %v134 = vld [vmem:[#allocation2 + $0x220] sm:$0xff]
    %v135 = vld [vmem:[#allocation2 + $0x228] sm:$0xff]
    %v136 = vld [vmem:[#allocation2 + $0x230] sm:$0xff]
    %v137 = vld [vmem:[#allocation2 + $0x238] sm:$0xff]
    %v138 = vld [vmem:[#allocation2 + $0x240] sm:$0xff]
    %v139 = vld [vmem:[#allocation2 + $0x248] sm:$0xff]
    %v140 = vld [vmem:[#allocation2 + $0x250] sm:$0xff]
    %v141 = vld [vmem:[#allocation2 + $0x258] sm:$0xff]
    %v142 = vld [vmem:[#allocation2 + $0x260] sm:$0xff]
    %v143 = vld [vmem:[#allocation2 + $0x268] sm:$0xff]
    %v144 = vld [vmem:[#allocation2 + $0x270] sm:$0xff]
    %v145 = vld [vmem:[#allocation2 + $0x278] sm:$0xff]
    %vm146 = vcmask 523264
    %v148 = vsel %vm146, %v65, 0
    %150 = vmatprep.subr.mxu0 %v67
    %151 = vmatpush1.msra.mxu0 %v66
    %152 = vmatprep.subr.mxu0 %v77
    %153 = vmatpush1.msra.mxu0 %v76
    %154 = vmatprep.subr.mxu0 %v87
    %155 = vmatpush1.msra.mxu0 %v86
    %156 = vmatprep.subr.mxu0 %v97
    %157 = vmatpush1.msra.mxu0 %v96
    %158 = vmatprep.subr.mxu0 %v107
    %159 = vmatpush1.msra.mxu0 %v106
    %160 = vmatprep.subr.mxu0 %v117
    %161 = vmatpush1.msra.mxu0 %v116
    %162 = vmatprep.subr.mxu0 %v127
    %163 = vmatpush1.msra.mxu0 %v126
    %164 = vmatprep.subr.mxu0 %v137
    %165 = vmatpush1.msra.mxu0 %v136
    %166 = vmatprep.subr.mxu0 0.0
    %167 = vmatpush1.msra.mxu0 0.0
    %168 = vmatprep.subr.mxu0 0.0
    %169 = vmatpush1.msra.mxu0 0.0
    %170 = vmatprep.subr.mxu0 0.0
    %171 = vmatpush1.msra.mxu0 0.0
    %172 = vmatprep.subr.mxu0 0.0
    %173 = vmatpush1.msra.mxu0 0.0
    %174 = vmatprep.subr.mxu0 0.0
    %175 = vmatpush1.msra.mxu0 0.0
    %176 = vmatprep.subr.mxu0 0.0
    %177 = vmatpush1.msra.mxu0 0.0
    %178 = vmatprep.subr.mxu0 0.0
    %179 = vmatpush1.msra.mxu0 0.0
    %180 = vmatprep.subr.mxu0 0.0
    %181 = vmatpush1.msra.mxu0 0.0
    %182 = vmatprep.subr.mxu0 0.0
    %183 = vmatpush1.msra.mxu0 0.0
    %184 = vmatprep.subr.mxu0 0.0
    %185 = vmatpush1.msra.mxu0 0.0
    %186 = vmatprep.subr.mxu0 0.0
    %187 = vmatpush1.msra.mxu0 0.0
    %188 = vmatprep.subr.mxu0 0.0
    %189 = vmatpush1.msra.mxu0 0.0
    %190 = vmatprep.subr.mxu0 0.0
    %191 = vmatpush1.msra.mxu0 0.0
    %192 = vmatprep.subr.mxu0 0.0
    %193 = vmatpush1.msra.mxu0 0.0
    %194 = vmatprep.subr.mxu0 0.0
    %195 = vmatpush1.msra.mxu0 0.0
    %196 = vmatprep.subr.mxu0 0.0
    %197 = vmatpush1.msra.mxu0 0.0
    %198 = vmatprep.subr.mxu0 0.0
    %199 = vmatpush1.msra.mxu0 0.0
    %200 = vmatprep.subr.mxu0 0.0
    %201 = vmatpush1.msra.mxu0 0.0
    %202 = vmatprep.subr.mxu0 0.0
    %203 = vmatpush1.msra.mxu0 0.0
    %204 = vmatprep.subr.mxu0 0.0
    %205 = vmatpush1.msra.mxu0 0.0
    %206 = vmatprep.subr.mxu0 0.0
    %207 = vmatpush1.msra.mxu0 0.0
    %208 = vmatprep.subr.mxu0 0.0
    %209 = vmatpush1.msra.mxu0 0.0
    %210 = vmatprep.subr.mxu0 0.0
    %211 = vmatpush1.msra.mxu0 0.0
    %212 = vmatprep.subr.mxu0 0.0
    %213 = vmatpush1.msra.mxu0 0.0
    %214 = vmatprep.mubr.f32.mxu0 0.0
    %215 = vmatmul.mubr.f32.gmra.mrb[0].mxu0 %v148
    %v216 = vpop.f32.mrb[0].mxu0
    %v217 = vadd.f32 0.0, %v216
    %v218 = vpop.f32.mrb[0].mxu0
    %v219 = vadd.f32 0.0, %v218
    %220 = vdwg.mxu0
    %221 = vmatprep.subr.mxu0 %v69
    %222 = vmatpush1.msra.mxu0 %v68
    %223 = vmatprep.subr.mxu0 %v79
    %224 = vmatpush1.msra.mxu0 %v78
    %225 = vmatprep.subr.mxu0 %v89
    %226 = vmatpush1.msra.mxu0 %v88
    %227 = vmatprep.subr.mxu0 %v99
    %228 = vmatpush1.msra.mxu0 %v98
    %229 = vmatprep.subr.mxu0 %v109
    %230 = vmatpush1.msra.mxu0 %v108
    %231 = vmatprep.subr.mxu0 %v119
    %232 = vmatpush1.msra.mxu0 %v118
    %233 = vmatprep.subr.mxu0 %v129
    %234 = vmatpush1.msra.mxu0 %v128
    %235 = vmatprep.subr.mxu0 %v139
    %236 = vmatpush1.msra.mxu0 %v138
    %237 = vmatprep.subr.mxu0 0.0
    %238 = vmatpush1.msra.mxu0 0.0
    %239 = vmatprep.subr.mxu0 0.0
    %240 = vmatpush1.msra.mxu0 0.0
    %241 = vmatprep.subr.mxu0 0.0
    %242 = vmatpush1.msra.mxu0 0.0
    %243 = vmatprep.subr.mxu0 0.0
    %244 = vmatpush1.msra.mxu0 0.0
    %245 = vmatprep.subr.mxu0 0.0
    %246 = vmatpush1.msra.mxu0 0.0
    %247 = vmatprep.subr.mxu0 0.0
    %248 = vmatpush1.msra.mxu0 0.0
    %249 = vmatprep.subr.mxu0 0.0
    %250 = vmatpush1.msra.mxu0 0.0
    %251 = vmatprep.subr.mxu0 0.0
    %252 = vmatpush1.msra.mxu0 0.0
    %253 = vmatprep.subr.mxu0 0.0
    %254 = vmatpush1.msra.mxu0 0.0
    %255 = vmatprep.subr.mxu0 0.0
    %256 = vmatpush1.msra.mxu0 0.0
    %257 = vmatprep.subr.mxu0 0.0
    %258 = vmatpush1.msra.mxu0 0.0
    %259 = vmatprep.subr.mxu0 0.0
    %260 = vmatpush1.msra.mxu0 0.0
    %261 = vmatprep.subr.mxu0 0.0
    %262 = vmatpush1.msra.mxu0 0.0
    %263 = vmatprep.subr.mxu0 0.0
    %264 = vmatpush1.msra.mxu0 0.0
    %265 = vmatprep.subr.mxu0 0.0
    %266 = vmatpush1.msra.mxu0 0.0
    %267 = vmatprep.subr.mxu0 0.0
    %268 = vmatpush1.msra.mxu0 0.0
    %269 = vmatprep.subr.mxu0 0.0
    %270 = vmatpush1.msra.mxu0 0.0
    %271 = vmatprep.subr.mxu0 0.0
    %272 = vmatpush1.msra.mxu0 0.0
    %273 = vmatprep.subr.mxu0 0.0
    %274 = vmatpush1.msra.mxu0 0.0
    %275 = vmatprep.subr.mxu0 0.0
    %276 = vmatpush1.msra.mxu0 0.0
    %277 = vmatprep.subr.mxu0 0.0
    %278 = vmatpush1.msra.mxu0 0.0
    %279 = vmatprep.subr.mxu0 0.0
    %280 = vmatpush1.msra.mxu0 0.0
    %281 = vmatprep.subr.mxu0 0.0
    %282 = vmatpush1.msra.mxu0 0.0
    %283 = vmatprep.subr.mxu0 0.0
    %284 = vmatpush1.msra.mxu0 0.0
    %285 = vmatprep.mubr.f32.mxu0 0.0
    %286 = vmatmul.mubr.f32.gmra.mrb[0].mxu0 %v148
    %v287 = vpop.f32.mrb[0].mxu0
    %v288 = vadd.f32 0.0, %v287
    %v289 = vpop.f32.mrb[0].mxu0
    %v290 = vadd.f32 0.0, %v289
    %291 = vdwg.mxu0
    %292 = vmatprep.subr.mxu0 %v71
    %293 = vmatpush1.msra.mxu0 %v70
    %294 = vmatprep.subr.mxu0 %v81
    %295 = vmatpush1.msra.mxu0 %v80
    %296 = vmatprep.subr.mxu0 %v91
    %297 = vmatpush1.msra.mxu0 %v90
    %298 = vmatprep.subr.mxu0 %v101
    %299 = vmatpush1.msra.mxu0 %v100
    %300 = vmatprep.subr.mxu0 %v111
    %301 = vmatpush1.msra.mxu0 %v110
    %302 = vmatprep.subr.mxu0 %v121
    %303 = vmatpush1.msra.mxu0 %v120
    %304 = vmatprep.subr.mxu0 %v131
    %305 = vmatpush1.msra.mxu0 %v130
    %306 = vmatprep.subr.mxu0 %v141
    %307 = vmatpush1.msra.mxu0 %v140
    %308 = vmatprep.subr.mxu0 0.0
    %309 = vmatpush1.msra.mxu0 0.0
    %310 = vmatprep.subr.mxu0 0.0
    %311 = vmatpush1.msra.mxu0 0.0
    %312 = vmatprep.subr.mxu0 0.0
    %313 = vmatpush1.msra.mxu0 0.0
    %314 = vmatprep.subr.mxu0 0.0
    %315 = vmatpush1.msra.mxu0 0.0
    %316 = vmatprep.subr.mxu0 0.0
    %317 = vmatpush1.msra.mxu0 0.0
    %318 = vmatprep.subr.mxu0 0.0
    %319 = vmatpush1.msra.mxu0 0.0
    %320 = vmatprep.subr.mxu0 0.0
    %321 = vmatpush1.msra.mxu0 0.0
    %322 = vmatprep.subr.mxu0 0.0
    %323 = vmatpush1.msra.mxu0 0.0
    %324 = vmatprep.subr.mxu0 0.0
    %325 = vmatpush1.msra.mxu0 0.0
    %326 = vmatprep.subr.mxu0 0.0
    %327 = vmatpush1.msra.mxu0 0.0
    %328 = vmatprep.subr.mxu0 0.0
    %329 = vmatpush1.msra.mxu0 0.0
    %330 = vmatprep.subr.mxu0 0.0
    %331 = vmatpush1.msra.mxu0 0.0
    %332 = vmatprep.subr.mxu0 0.0
    %333 = vmatpush1.msra.mxu0 0.0
    %334 = vmatprep.subr.mxu0 0.0
    %335 = vmatpush1.msra.mxu0 0.0
    %336 = vmatprep.subr.mxu0 0.0
    %337 = vmatpush1.msra.mxu0 0.0
    %338 = vmatprep.subr.mxu0 0.0
    %339 = vmatpush1.msra.mxu0 0.0
    %340 = vmatprep.subr.mxu0 0.0
    %341 = vmatpush1.msra.mxu0 0.0
    %342 = vmatprep.subr.mxu0 0.0
    %343 = vmatpush1.msra.mxu0 0.0
    %344 = vmatprep.subr.mxu0 0.0
    %345 = vmatpush1.msra.mxu0 0.0
    %346 = vmatprep.subr.mxu0 0.0
    %347 = vmatpush1.msra.mxu0 0.0
    %348 = vmatprep.subr.mxu0 0.0
    %349 = vmatpush1.msra.mxu0 0.0
    %350 = vmatprep.subr.mxu0 0.0
    %351 = vmatpush1.msra.mxu0 0.0
    %352 = vmatprep.subr.mxu0 0.0
    %353 = vmatpush1.msra.mxu0 0.0
    %354 = vmatprep.subr.mxu0 0.0
    %355 = vmatpush1.msra.mxu0 0.0
    %356 = vmatprep.mubr.f32.mxu0 0.0
    %357 = vmatmul.mubr.f32.gmra.mrb[0].mxu0 %v148
    %v358 = vpop.f32.mrb[0].mxu0
    %v359 = vadd.f32 0.0, %v358
    %v360 = vpop.f32.mrb[0].mxu0
    %v361 = vadd.f32 0.0, %v360
    %362 = vdwg.mxu0
    %363 = vmatprep.subr.mxu0 %v73
    %364 = vmatpush1.msra.mxu0 %v72
    %365 = vmatprep.subr.mxu0 %v83
    %366 = vmatpush1.msra.mxu0 %v82
    %367 = vmatprep.subr.mxu0 %v93
    %368 = vmatpush1.msra.mxu0 %v92
    %369 = vmatprep.subr.mxu0 %v103
    %370 = vmatpush1.msra.mxu0 %v102
    %371 = vmatprep.subr.mxu0 %v113
    %372 = vmatpush1.msra.mxu0 %v112
    %373 = vmatprep.subr.mxu0 %v123
    %374 = vmatpush1.msra.mxu0 %v122
    %375 = vmatprep.subr.mxu0 %v133
    %376 = vmatpush1.msra.mxu0 %v132
    %377 = vmatprep.subr.mxu0 %v143
    %378 = vmatpush1.msra.mxu0 %v142
    %379 = vmatprep.subr.mxu0 0.0
    %380 = vmatpush1.msra.mxu0 0.0
    %381 = vmatprep.subr.mxu0 0.0
    %382 = vmatpush1.msra.mxu0 0.0
    %383 = vmatprep.subr.mxu0 0.0
    %384 = vmatpush1.msra.mxu0 0.0
    %385 = vmatprep.subr.mxu0 0.0
    %386 = vmatpush1.msra.mxu0 0.0
    %387 = vmatprep.subr.mxu0 0.0
    %388 = vmatpush1.msra.mxu0 0.0
    %389 = vmatprep.subr.mxu0 0.0
    %390 = vmatpush1.msra.mxu0 0.0
    %391 = vmatprep.subr.mxu0 0.0
    %392 = vmatpush1.msra.mxu0 0.0
    %393 = vmatprep.subr.mxu0 0.0
    %394 = vmatpush1.msra.mxu0 0.0
    %395 = vmatprep.subr.mxu0 0.0
    %396 = vmatpush1.msra.mxu0 0.0
    %397 = vmatprep.subr.mxu0 0.0
    %398 = vmatpush1.msra.mxu0 0.0
    %399 = vmatprep.subr.mxu0 0.0
    %400 = vmatpush1.msra.mxu0 0.0
    %401 = vmatprep.subr.mxu0 0.0
    %402 = vmatpush1.msra.mxu0 0.0
    %403 = vmatprep.subr.mxu0 0.0
    %404 = vmatpush1.msra.mxu0 0.0
    %405 = vmatprep.subr.mxu0 0.0
    %406 = vmatpush1.msra.mxu0 0.0
    %407 = vmatprep.subr.mxu0 0.0
    %408 = vmatpush1.msra.mxu0 0.0
    %409 = vmatprep.subr.mxu0 0.0
    %410 = vmatpush1.msra.mxu0 0.0
    %411 = vmatprep.subr.mxu0 0.0
    %412 = vmatpush1.msra.mxu0 0.0
    %413 = vmatprep.subr.mxu0 0.0
    %414 = vmatpush1.msra.mxu0 0.0
    %415 = vmatprep.subr.mxu0 0.0
    %416 = vmatpush1.msra.mxu0 0.0
    %417 = vmatprep.subr.mxu0 0.0
    %418 = vmatpush1.msra.mxu0 0.0
    %419 = vmatprep.subr.mxu0 0.0
    %420 = vmatpush1.msra.mxu0 0.0
    %421 = vmatprep.subr.mxu0 0.0
    %422 = vmatpush1.msra.mxu0 0.0
    %423 = vmatprep.subr.mxu0 0.0
    %424 = vmatpush1.msra.mxu0 0.0
    %425 = vmatprep.subr.mxu0 0.0
    %426 = vmatpush1.msra.mxu0 0.0
    %427 = vmatprep.mubr.f32.mxu0 0.0
    %428 = vmatmul.mubr.f32.gmra.mrb[0].mxu0 %v148
    %v429 = vpop.f32.mrb[0].mxu0
    %v430 = vadd.f32 0.0, %v429
    %v431 = vpop.f32.mrb[0].mxu0
    %v432 = vadd.f32 0.0, %v431
    %433 = vdwg.mxu0
    %434 = vmatprep.subr.mxu0 %v75
    %435 = vmatpush1.msra.mxu0 %v74
    %436 = vmatprep.subr.mxu0 %v85
    %437 = vmatpush1.msra.mxu0 %v84
    %438 = vmatprep.subr.mxu0 %v95
    %439 = vmatpush1.msra.mxu0 %v94
    %440 = vmatprep.subr.mxu0 %v105
    %441 = vmatpush1.msra.mxu0 %v104
    %442 = vmatprep.subr.mxu0 %v115
    %443 = vmatpush1.msra.mxu0 %v114
    %444 = vmatprep.subr.mxu0 %v125
    %445 = vmatpush1.msra.mxu0 %v124
    %446 = vmatprep.subr.mxu0 %v135
    %447 = vmatpush1.msra.mxu0 %v134
    %448 = vmatprep.subr.mxu0 %v145
    %449 = vmatpush1.msra.mxu0 %v144
    %450 = vmatprep.subr.mxu0 0.0
    %451 = vmatpush1.msra.mxu0 0.0
    %452 = vmatprep.subr.mxu0 0.0
    %453 = vmatpush1.msra.mxu0 0.0
    %454 = vmatprep.subr.mxu0 0.0
    %455 = vmatpush1.msra.mxu0 0.0
    %456 = vmatprep.subr.mxu0 0.0
    %457 = vmatpush1.msra.mxu0 0.0
    %458 = vmatprep.subr.mxu0 0.0
    %459 = vmatpush1.msra.mxu0 0.0
    %460 = vmatprep.subr.mxu0 0.0
    %461 = vmatpush1.msra.mxu0 0.0
    %462 = vmatprep.subr.mxu0 0.0
    %463 = vmatpush1.msra.mxu0 0.0
    %464 = vmatprep.subr.mxu0 0.0
    %465 = vmatpush1.msra.mxu0 0.0
    %466 = vmatprep.subr.mxu0 0.0
    %467 = vmatpush1.msra.mxu0 0.0
    %468 = vmatprep.subr.mxu0 0.0
    %469 = vmatpush1.msra.mxu0 0.0
    %470 = vmatprep.subr.mxu0 0.0
    %471 = vmatpush1.msra.mxu0 0.0
    %472 = vmatprep.subr.mxu0 0.0
    %473 = vmatpush1.msra.mxu0 0.0
    %474 = vmatprep.subr.mxu0 0.0
    %475 = vmatpush1.msra.mxu0 0.0
    %476 = vmatprep.subr.mxu0 0.0
    %477 = vmatpush1.msra.mxu0 0.0
    %478 = vmatprep.subr.mxu0 0.0
    %479 = vmatpush1.msra.mxu0 0.0
    %480 = vmatprep.subr.mxu0 0.0
    %481 = vmatpush1.msra.mxu0 0.0
    %482 = vmatprep.subr.mxu0 0.0
    %483 = vmatpush1.msra.mxu0 0.0
    %484 = vmatprep.subr.mxu0 0.0
    %485 = vmatpush1.msra.mxu0 0.0
    %486 = vmatprep.subr.mxu0 0.0
    %487 = vmatpush1.msra.mxu0 0.0
    %488 = vmatprep.subr.mxu0 0.0
    %489 = vmatpush1.msra.mxu0 0.0
    %490 = vmatprep.subr.mxu0 0.0
    %491 = vmatpush1.msra.mxu0 0.0
    %492 = vmatprep.subr.mxu0 0.0
    %493 = vmatpush1.msra.mxu0 0.0
    %494 = vmatprep.subr.mxu0 0.0
    %495 = vmatpush1.msra.mxu0 0.0
    %496 = vmatprep.subr.mxu0 0.0
    %497 = vmatpush1.msra.mxu0 0.0
    %498 = vmatprep.mubr.f32.mxu0 0.0
    %499 = vmatmul.mubr.f32.gmra.mrb[0].mxu0 %v148
    %v500 = vpop.f32.mrb[0].mxu0
    %v501 = vadd.f32 0.0, %v500
    %v502 = vpop.f32.mrb[0].mxu0
    %v503 = vadd.f32 0.0, %v502
    %504 = vdwg.mxu0
    %v505 = vmax.f32 %v217, %v361
    %v506 = vmax.f32 %v219, %v430
    %v507 = vmax.f32 %v288, %v432
    %v508 = vmax.f32 %v290, %v501
    %v509 = vmax.f32 %v359, %v503
    %v510 = vld [vmem:[#allocation5] sm:$0xff]
    %v511 = vld [vmem:[#allocation5 + $0x8] sm:$0xff]
    %v512 = vld [vmem:[#allocation5 + $0x10] sm:$0xff]
    %v513 = vld [vmem:[#allocation5 + $0x18] sm:$0xff]
    %v514 = vld [vmem:[#allocation5 + $0x20] sm:$0xff]
    %v515 = vld [vmem:[#allocation5 + $0x28] sm:$0xff]
    %v516 = vld [vmem:[#allocation5 + $0x30] sm:$0xff]
    %v517 = vld [vmem:[#allocation5 + $0x38] sm:$0xff]
    %v518 = vld [vmem:[#allocation5 + $0x40] sm:$0xff]
    %v519 = vld [vmem:[#allocation5 + $0x48] sm:$0xff]
    %v520 = vld [vmem:[#allocation5 + $0x50] sm:$0xff]
    %v521 = vld [vmem:[#allocation5 + $0x58] sm:$0xff]
    %v522 = vld [vmem:[#allocation5 + $0x60] sm:$0xff]
    %v523 = vld [vmem:[#allocation5 + $0x68] sm:$0xff]
    %v524 = vld [vmem:[#allocation5 + $0x70] sm:$0xff]
    %v525 = vld [vmem:[#allocation5 + $0x78] sm:$0xff]
    %v526 = vld [vmem:[#allocation5 + $0x80] sm:$0xff]
    %v527 = vld [vmem:[#allocation5 + $0x88] sm:$0xff]
    %v528 = vld [vmem:[#allocation5 + $0x90] sm:$0xff]
    %v529 = vld [vmem:[#allocation5 + $0x98] sm:$0xff]
    %v530 = vld [vmem:[#allocation5 + $0xa0] sm:$0xff]
    %v531 = vld [vmem:[#allocation5 + $0xa8] sm:$0xff]
    %v532 = vld [vmem:[#allocation5 + $0xb0] sm:$0xff]
    %v533 = vld [vmem:[#allocation5 + $0xb8] sm:$0xff]
    %v534 = vld [vmem:[#allocation5 + $0xc0] sm:$0xff]
    %v535 = vld [vmem:[#allocation5 + $0xc8] sm:$0xff]
    %v536 = vld [vmem:[#allocation5 + $0xd0] sm:$0xff]
    %v537 = vld [vmem:[#allocation5 + $0xd8] sm:$0xff]
    %v538 = vld [vmem:[#allocation5 + $0xe0] sm:$0xff]
    %v539 = vld [vmem:[#allocation5 + $0xe8] sm:$0xff]
    %v540 = vld [vmem:[#allocation5 + $0xf0] sm:$0xff]
    %v541 = vld [vmem:[#allocation5 + $0xf8] sm:$0xff]
    %v542 = vld [vmem:[#allocation5 + $0x100] sm:$0xff]
    %v543 = vld [vmem:[#allocation5 + $0x108] sm:$0xff]
    %v544 = vld [vmem:[#allocation5 + $0x110] sm:$0xff]
    %v545 = vld [vmem:[#allocation5 + $0x118] sm:$0xff]
    %v546 = vld [vmem:[#allocation5 + $0x120] sm:$0xff]
    %v547 = vld [vmem:[#allocation5 + $0x128] sm:$0xff]
    %v548 = vld [vmem:[#allocation5 + $0x130] sm:$0xff]
    %v549 = vld [vmem:[#allocation5 + $0x138] sm:$0xff]
    %v550 = vld [vmem:[#allocation5 + $0x140] sm:$0xff]
    %v551 = vld [vmem:[#allocation5 + $0x148] sm:$0xff]
    %v552 = vld [vmem:[#allocation5 + $0x150] sm:$0xff]
    %v553 = vld [vmem:[#allocation5 + $0x158] sm:$0xff]
    %v554 = vld [vmem:[#allocation5 + $0x160] sm:$0xff]
    %v555 = vld [vmem:[#allocation5 + $0x168] sm:$0xff]
    %v556 = vld [vmem:[#allocation5 + $0x170] sm:$0xff]
    %v557 = vld [vmem:[#allocation5 + $0x178] sm:$0xff]
    %v558 = vld [vmem:[#allocation5 + $0x180] sm:$0xff]
    %v559 = vld [vmem:[#allocation5 + $0x188] sm:$0xff]
    %v560 = vld [vmem:[#allocation5 + $0x190] sm:$0xff]
    %v561 = vld [vmem:[#allocation5 + $0x198] sm:$0xff]
    %v562 = vld [vmem:[#allocation5 + $0x1a0] sm:$0xff]
    %v563 = vld [vmem:[#allocation5 + $0x1a8] sm:$0xff]
    %v564 = vld [vmem:[#allocation5 + $0x1b0] sm:$0xff]
    %v565 = vld [vmem:[#allocation5 + $0x1b8] sm:$0xff]
    %v566 = vld [vmem:[#allocation5 + $0x1c0] sm:$0xff]
    %v567 = vld [vmem:[#allocation5 + $0x1c8] sm:$0xff]
    %v568 = vld [vmem:[#allocation5 + $0x1d0] sm:$0xff]
    %v569 = vld [vmem:[#allocation5 + $0x1d8] sm:$0xff]
    %v570 = vld [vmem:[#allocation5 + $0x1e0] sm:$0xff]
    %v571 = vld [vmem:[#allocation5 + $0x1e8] sm:$0xff]
    %v572 = vld [vmem:[#allocation5 + $0x1f0] sm:$0xff]
    %v573 = vld [vmem:[#allocation5 + $0x1f8] sm:$0xff]
    %v574 = vld [vmem:[#allocation5 + $0x200] sm:$0xff]
    %v575 = vld [vmem:[#allocation5 + $0x208] sm:$0xff]
    %v576 = vld [vmem:[#allocation5 + $0x210] sm:$0xff]
    %v577 = vld [vmem:[#allocation5 + $0x218] sm:$0xff]
    %v578 = vld [vmem:[#allocation5 + $0x220] sm:$0xff]
    %v579 = vld [vmem:[#allocation5 + $0x228] sm:$0xff]
    %v580 = vld [vmem:[#allocation5 + $0x230] sm:$0xff]
    %v581 = vld [vmem:[#allocation5 + $0x238] sm:$0xff]
    %v582 = vld [vmem:[#allocation5 + $0x240] sm:$0xff]
    %v583 = vld [vmem:[#allocation5 + $0x248] sm:$0xff]
    %v584 = vld [vmem:[#allocation5 + $0x250] sm:$0xff]
    %v585 = vld [vmem:[#allocation5 + $0x258] sm:$0xff]
    %v586 = vld [vmem:[#allocation5 + $0x260] sm:$0xff]
    %v587 = vld [vmem:[#allocation5 + $0x268] sm:$0xff]
    %v588 = vld [vmem:[#allocation5 + $0x270] sm:$0xff]
    %v589 = vld [vmem:[#allocation5 + $0x278] sm:$0xff]
    %v590 = vld [vmem:[%s3] sm:$0x1]
    %v592 = vlaneseq
    %v593 = vshrl.u32 %v592, 7
    %v594 = vsub.s32 0, %v593
    %v595 = vrot.slane %v590, %v594
    %597 = vmatprep.subr.mxu0 0.0
    %598 = vmatpush1.msra.mxu0 %v510
    %599 = vmatprep.subr.mxu0 0.0
    %600 = vmatpush1.msra.mxu0 %v511
    %601 = vmatprep.subr.mxu0 0.0
    %602 = vmatpush1.msra.mxu0 %v512
    %603 = vmatprep.subr.mxu0 0.0
    %604 = vmatpush1.msra.mxu0 %v513
    %605 = vmatprep.subr.mxu0 0.0
    %606 = vmatpush1.msra.mxu0 %v514
    %607 = vmatprep.subr.mxu0 0.0
    %608 = vmatpush1.msra.mxu0 %v515
    %609 = vmatprep.subr.mxu0 0.0
    %610 = vmatpush1.msra.mxu0 %v516
    %611 = vmatprep.subr.mxu0 0.0
    %612 = vmatpush1.msra.mxu0 %v517
    %613 = vmatprep.subr.mxu0 0.0
    %614 = vmatpush1.msra.mxu0 %v518
    %615 = vmatprep.subr.mxu0 0.0
    %616 = vmatpush1.msra.mxu0 %v519
    %617 = vmatprep.subr.mxu0 0.0
    %618 = vmatpush1.msra.mxu0 %v520
    %619 = vmatprep.subr.mxu0 0.0
    %620 = vmatpush1.msra.mxu0 %v521
    %621 = vmatprep.subr.mxu0 0.0
    %622 = vmatpush1.msra.mxu0 %v522
    %623 = vmatprep.subr.mxu0 0.0
    %624 = vmatpush1.msra.mxu0 %v523
    %625 = vmatprep.subr.mxu0 0.0
    %626 = vmatpush1.msra.mxu0 %v524
    %627 = vmatprep.subr.mxu0 0.0
    %628 = vmatpush1.msra.mxu0 %v525
    %629 = vmatprep.subr.mxu0 0.0
    %630 = vmatpush1.msra.mxu0 %v526
    %631 = vmatprep.subr.mxu0 0.0
    %632 = vmatpush1.msra.mxu0 %v527
    %633 = vmatprep.subr.mxu0 0.0
    %634 = vmatpush1.msra.mxu0 %v528
    %635 = vmatprep.subr.mxu0 0.0
    %636 = vmatpush1.msra.mxu0 %v529
    %637 = vmatprep.subr.mxu0 0.0
    %638 = vmatpush1.msra.mxu0 %v530
    %639 = vmatprep.subr.mxu0 0.0
    %640 = vmatpush1.msra.mxu0 %v531
    %641 = vmatprep.subr.mxu0 0.0
    %642 = vmatpush1.msra.mxu0 %v532
    %643 = vmatprep.subr.mxu0 0.0
    %644 = vmatpush1.msra.mxu0 %v533
    %645 = vmatprep.subr.mxu0 0.0
    %646 = vmatpush1.msra.mxu0 %v534
    %647 = vmatprep.subr.mxu0 0.0
    %648 = vmatpush1.msra.mxu0 %v535
    %649 = vmatprep.subr.mxu0 0.0
    %650 = vmatpush1.msra.mxu0 %v536
    %651 = vmatprep.subr.mxu0 0.0
    %652 = vmatpush1.msra.mxu0 %v537
    %653 = vmatprep.subr.mxu0 0.0
    %654 = vmatpush1.msra.mxu0 %v538
    %655 = vmatprep.subr.mxu0 0.0
    %656 = vmatpush1.msra.mxu0 %v539
    %657 = vmatprep.subr.mxu0 0.0
    %658 = vmatpush1.msra.mxu0 %v540
    %659 = vmatprep.subr.mxu0 0.0
    %660 = vmatpush1.msra.mxu0 %v541
    %661 = vmatprep.mubr.f32.mxu0 %v506
    %662 = vmatmul.mubr.f32.gmra.mrb[0].mxu0 %v505
    %v663 = vpop.f32.mrb[0].mxu0
    %v664 = vadd.f32 %v595, %v663
    %v665 = vpop.f32.mrb[0].mxu0
    %666 = vdwg.mxu0
    %667 = vmatprep.subr.mxu0 0.0
    %668 = vmatpush1.msra.mxu0 %v542
    %669 = vmatprep.subr.mxu0 0.0
    %670 = vmatpush1.msra.mxu0 %v543
    %671 = vmatprep.subr.mxu0 0.0
    %672 = vmatpush1.msra.mxu0 %v544
    %673 = vmatprep.subr.mxu0 0.0
    %674 = vmatpush1.msra.mxu0 %v545
    %675 = vmatprep.subr.mxu0 0.0
    %676 = vmatpush1.msra.mxu0 %v546
    %677 = vmatprep.subr.mxu0 0.0
    %678 = vmatpush1.msra.mxu0 %v547
    %679 = vmatprep.subr.mxu0 0.0
    %680 = vmatpush1.msra.mxu0 %v548
    %681 = vmatprep.subr.mxu0 0.0
    %682 = vmatpush1.msra.mxu0 %v549
    %683 = vmatprep.subr.mxu0 0.0
    %684 = vmatpush1.msra.mxu0 %v550
    %685 = vmatprep.subr.mxu0 0.0
    %686 = vmatpush1.msra.mxu0 %v551
    %687 = vmatprep.subr.mxu0 0.0
    %688 = vmatpush1.msra.mxu0 %v552
    %689 = vmatprep.subr.mxu0 0.0
    %690 = vmatpush1.msra.mxu0 %v553
    %691 = vmatprep.subr.mxu0 0.0
    %692 = vmatpush1.msra.mxu0 %v554
    %693 = vmatprep.subr.mxu0 0.0
    %694 = vmatpush1.msra.mxu0 %v555
    %695 = vmatprep.subr.mxu0 0.0
    %696 = vmatpush1.msra.mxu0 %v556
    %697 = vmatprep.subr.mxu0 0.0
    %698 = vmatpush1.msra.mxu0 %v557
    %699 = vmatprep.subr.mxu0 0.0
    %700 = vmatpush1.msra.mxu0 %v558
    %701 = vmatprep.subr.mxu0 0.0
    %702 = vmatpush1.msra.mxu0 %v559
    %703 = vmatprep.subr.mxu0 0.0
    %704 = vmatpush1.msra.mxu0 %v560
    %705 = vmatprep.subr.mxu0 0.0
    %706 = vmatpush1.msra.mxu0 %v561
    %707 = vmatprep.subr.mxu0 0.0
    %708 = vmatpush1.msra.mxu0 %v562
    %709 = vmatprep.subr.mxu0 0.0
    %710 = vmatpush1.msra.mxu0 %v563
    %711 = vmatprep.subr.mxu0 0.0
    %712 = vmatpush1.msra.mxu0 %v564
    %713 = vmatprep.subr.mxu0 0.0
    %714 = vmatpush1.msra.mxu0 %v565
    %715 = vmatprep.subr.mxu0 0.0
    %716 = vmatpush1.msra.mxu0 %v566
    %717 = vmatprep.subr.mxu0 0.0
    %718 = vmatpush1.msra.mxu0 %v567
    %719 = vmatprep.subr.mxu0 0.0
    %720 = vmatpush1.msra.mxu0 %v568
    %721 = vmatprep.subr.mxu0 0.0
    %722 = vmatpush1.msra.mxu0 %v569
    %723 = vmatprep.subr.mxu0 0.0
    %724 = vmatpush1.msra.mxu0 %v570
    %725 = vmatprep.subr.mxu0 0.0
    %726 = vmatpush1.msra.mxu0 %v571
    %727 = vmatprep.subr.mxu0 0.0
    %728 = vmatpush1.msra.mxu0 %v572
    %729 = vmatprep.subr.mxu0 0.0
    %730 = vmatpush1.msra.mxu0 %v573
    %731 = vmatprep.mubr.f32.mxu0 %v508
    %732 = vmatmul.mubr.f32.gmra.mrb[0].mxu0 %v507
    %v733 = vpop.f32.mrb[0].mxu0
    %v734 = vadd.f32 %v664, %v733
    %v735 = vpop.f32.mrb[0].mxu0
    %736 = vdwg.mxu0
    %737 = vmatprep.subr.mxu0 0.0
    %738 = vmatpush1.msra.mxu0 %v574
    %739 = vmatprep.subr.mxu0 0.0
    %740 = vmatpush1.msra.mxu0 %v575
    %741 = vmatprep.subr.mxu0 0.0
    %742 = vmatpush1.msra.mxu0 %v576
    %743 = vmatprep.subr.mxu0 0.0
    %744 = vmatpush1.msra.mxu0 %v577
    %745 = vmatprep.subr.mxu0 0.0
    %746 = vmatpush1.msra.mxu0 %v578
    %747 = vmatprep.subr.mxu0 0.0
    %748 = vmatpush1.msra.mxu0 %v579
    %749 = vmatprep.subr.mxu0 0.0
    %750 = vmatpush1.msra.mxu0 %v580
    %751 = vmatprep.subr.mxu0 0.0
    %752 = vmatpush1.msra.mxu0 %v581
    %753 = vmatprep.subr.mxu0 0.0
    %754 = vmatpush1.msra.mxu0 %v582
    %755 = vmatprep.subr.mxu0 0.0
    %756 = vmatpush1.msra.mxu0 %v583
    %757 = vmatprep.subr.mxu0 0.0
    %758 = vmatpush1.msra.mxu0 %v584
    %759 = vmatprep.subr.mxu0 0.0
    %760 = vmatpush1.msra.mxu0 %v585
    %761 = vmatprep.subr.mxu0 0.0
    %762 = vmatpush1.msra.mxu0 %v586
    %763 = vmatprep.subr.mxu0 0.0
    %764 = vmatpush1.msra.mxu0 %v587
    %765 = vmatprep.subr.mxu0 0.0
    %766 = vmatpush1.msra.mxu0 %v588
    %767 = vmatprep.subr.mxu0 0.0
    %768 = vmatpush1.msra.mxu0 %v589
    %769 = vmatprep.subr.mxu0 0.0
    %770 = vmatpush1.msra.mxu0 0.0
    %771 = vmatprep.subr.mxu0 0.0
    %772 = vmatpush1.msra.mxu0 0.0
    %773 = vmatprep.subr.mxu0 0.0
    %774 = vmatpush1.msra.mxu0 0.0
    %775 = vmatprep.subr.mxu0 0.0
    %776 = vmatpush1.msra.mxu0 0.0
    %777 = vmatprep.subr.mxu0 0.0
    %778 = vmatpush1.msra.mxu0 0.0
    %779 = vmatprep.subr.mxu0 0.0
    %780 = vmatpush1.msra.mxu0 0.0
    %781 = vmatprep.subr.mxu0 0.0
    %782 = vmatpush1.msra.mxu0 0.0
    %783 = vmatprep.subr.mxu0 0.0
    %784 = vmatpush1.msra.mxu0 0.0
    %785 = vmatprep.subr.mxu0 0.0
    %786 = vmatpush1.msra.mxu0 0.0
    %787 = vmatprep.subr.mxu0 0.0
    %788 = vmatpush1.msra.mxu0 0.0
    %789 = vmatprep.subr.mxu0 0.0
    %790 = vmatpush1.msra.mxu0 0.0
    %791 = vmatprep.subr.mxu0 0.0
    %792 = vmatpush1.msra.mxu0 0.0
    %793 = vmatprep.subr.mxu0 0.0
    %794 = vmatpush1.msra.mxu0 0.0
    %795 = vmatprep.subr.mxu0 0.0
    %796 = vmatpush1.msra.mxu0 0.0
    %797 = vmatprep.subr.mxu0 0.0
    %798 = vmatpush1.msra.mxu0 0.0
    %799 = vmatprep.subr.mxu0 0.0
    %800 = vmatpush1.msra.mxu0 0.0
    %801 = vmatprep.mubr.f32.mxu0 0.0
    %802 = vmatmul.mubr.f32.gmra.mrb[0].mxu0 %v509
    %v803 = vpop.f32.mrb[0].mxu0
    %v804 = vadd.f32 %v734, %v803
    %v805 = vpop.f32.mrb[0].mxu0
    %806 = vdwg.mxu0
    %v807 = vtanh.pop %v804
    %v808 = vld [vmem:[#allocation7] sm:$0xff]
    %v809 = vld [vmem:[#allocation7 + $0x8] sm:$0xff]
    %v810 = vld [vmem:[#allocation7 + $0x10] sm:$0xff]
    %v811 = vld [vmem:[#allocation7 + $0x18] sm:$0xff]
    %v812 = vld [vmem:[%s5] sm:$0x1]
    %v814 = vlaneseq
    %v815 = vshrl.u32 %v814, 7
    %v816 = vsub.s32 0, %v815
    %v817 = vrot.slane %v812, %v816
    %vm819 = vcmask 261120
    %v821 = vsel %vm819, %v807, 0
    %823 = vmatprep.subr.mxu0 0.0
    %824 = vmatpush1.msra.mxu0 %v808
    %825 = vmatprep.subr.mxu0 0.0
    %826 = vmatpush1.msra.mxu0 %v809
    %827 = vmatprep.subr.mxu0 0.0
    %828 = vmatpush1.msra.mxu0 %v810
    %829 = vmatprep.subr.mxu0 0.0
    %830 = vmatpush1.msra.mxu0 %v811
    %831 = vmatprep.subr.mxu0 0.0
    %832 = vmatpush1.msra.mxu0 0.0
    %833 = vmatprep.subr.mxu0 0.0
    %834 = vmatpush1.msra.mxu0 0.0
    %835 = vmatprep.subr.mxu0 0.0
    %836 = vmatpush1.msra.mxu0 0.0
    %837 = vmatprep.subr.mxu0 0.0
    %838 = vmatpush1.msra.mxu0 0.0
    %839 = vmatprep.subr.mxu0 0.0
    %840 = vmatpush1.msra.mxu0 0.0
    %841 = vmatprep.subr.mxu0 0.0
    %842 = vmatpush1.msra.mxu0 0.0
    %843 = vmatprep.subr.mxu0 0.0
    %844 = vmatpush1.msra.mxu0 0.0
    %845 = vmatprep.subr.mxu0 0.0
    %846 = vmatpush1.msra.mxu0 0.0
    %847 = vmatprep.subr.mxu0 0.0
    %848 = vmatpush1.msra.mxu0 0.0
    %849 = vmatprep.subr.mxu0 0.0
    %850 = vmatpush1.msra.mxu0 0.0
    %851 = vmatprep.subr.mxu0 0.0
    %852 = vmatpush1.msra.mxu0 0.0
    %853 = vmatprep.subr.mxu0 0.0
    %854 = vmatpush1.msra.mxu0 0.0
    %855 = vmatprep.subr.mxu0 0.0
    %856 = vmatpush1.msra.mxu0 0.0
    %857 = vmatprep.subr.mxu0 0.0
    %858 = vmatpush1.msra.mxu0 0.0
    %859 = vmatprep.subr.mxu0 0.0
    %860 = vmatpush1.msra.mxu0 0.0
    %861 = vmatprep.subr.mxu0 0.0
    %862 = vmatpush1.msra.mxu0 0.0
    %863 = vmatprep.subr.mxu0 0.0
    %864 = vmatpush1.msra.mxu0 0.0
    %865 = vmatprep.subr.mxu0 0.0
    %866 = vmatpush1.msra.mxu0 0.0
    %867 = vmatprep.subr.mxu0 0.0
    %868 = vmatpush1.msra.mxu0 0.0
    %869 = vmatprep.subr.mxu0 0.0
    %870 = vmatpush1.msra.mxu0 0.0
    %871 = vmatprep.subr.mxu0 0.0
    %872 = vmatpush1.msra.mxu0 0.0
    %873 = vmatprep.subr.mxu0 0.0
    %874 = vmatpush1.msra.mxu0 0.0
    %875 = vmatprep.subr.mxu0 0.0
    %876 = vmatpush1.msra.mxu0 0.0
    %877 = vmatprep.subr.mxu0 0.0
    %878 = vmatpush1.msra.mxu0 0.0
    %879 = vmatprep.subr.mxu0 0.0
    %880 = vmatpush1.msra.mxu0 0.0
    %881 = vmatprep.subr.mxu0 0.0
    %882 = vmatpush1.msra.mxu0 0.0
    %883 = vmatprep.subr.mxu0 0.0
    %884 = vmatpush1.msra.mxu0 0.0
    %885 = vmatprep.subr.mxu0 0.0
    %886 = vmatpush1.msra.mxu0 0.0
    %887 = vmatprep.mubr.f32.mxu0 0.0
    %888 = vmatmul.mubr.f32.gmra.mrb[0].mxu0 %v821
    %v889 = vpop.f32.mrb[0].mxu0
    %v890 = vadd.f32 %v817, %v889
    %v891 = vpop.f32.mrb[0].mxu0
    %892 = vdwg.mxu0
    %vm893 = vcmask 74752
    %894 = vst.msk [vmem:[#allocation8] sm:$0x3] %vm893, %v890
    // Predicated region
    $region38: #{a_call__.1} parent=1 // pred_check
      _
    $region39: #{a_call__.1} parent=1 // pred_check_branch
      %896 = sbr.rel (0) target = $region41
    $region40: #{a_call__.1} parent=1 // pred_region
      %s898 = ssub.s32 32, 32
      %899 = vsyncadd [#allocation4], %s898
      %s901 = sshll.u32 [#allocation8], 4
      %s902 = int_to_ptr.vmem [resolvable:$true] %s901
      %904 = dma.vmem_to_hbm [thread:$0]  %s902, 32, %s6, [#allocation4]
    $region41: #{a_call__.1} parent=1 // pred_fallthru
      _
    // Predicated region
    $region42: #{a_call__.1} parent=1 // pred_check
      _
    $region43: #{a_call__.1} parent=1 // pred_check_branch
      %906 = sbr.rel (0) target = $region45
    $region44: #{a_call__.1} parent=1 // pred_region
      %907 = dma.done [#allocation4], 32
    $region45: #{a_call__.1} parent=1 // pred_fallthru
      _
    %908 = vsyncpa [#allocation3], 1
    %909 = vsyncpa [#allocation6], 1
    %910 = vsyncpa [#allocation4], 1

</llo_original>
